<compile_context>
chip_gen: v5e
topology: v5e:2x2
jax: 0.10.0
libtpu: 0.0.40
codegen_flags: <defaults>
</compile_context>

<pallas_src>
import functools

import jax
import jax.numpy as jnp
from jax.experimental import pallas as pl
from jax.experimental.pallas import tpu as pltpu


def _round_up(v, m):
    return -(-v // m) * m


def _slab_layout(S, A):
    """Row offsets inside the compact packed parameter slab."""
    w1t_row = 0            # rows [0, S)            : w1^T, (S, H), H on the lane axis
    b1_row = S             # row  S                 : b1,   (1, H)
    w2_row = S + 1         # rows [S+1, S+1+A)      : w2 row-major, (A, H)
    b2_row = S + 1 + A     # row  S+1+A, lanes [0,A): b2
    n_rows = max(8, _round_up(S + A + 2, 8))
    return w1t_row, b1_row, w2_row, b2_row, n_rows


def pack_params(w1, b1, w2, b2):
    """One-time packing of PyTorch-layout Linear params (w1:(H,S), b1:(H,),
    w2:(A,H), b2:(A,)) into a single compact (8, H) f32 slab. Call at init,
    not per step (transposes / reshapes hoisted off the forward path)."""
    H, S = w1.shape
    A = w2.shape[0]
    w1t_row, b1_row, w2_row, b2_row, n_rows = _slab_layout(S, A)
    slab = jnp.zeros((n_rows, H), jnp.float32)
    slab = slab.at[w1t_row:w1t_row + S, :].set(jnp.asarray(w1, jnp.float32).T)
    slab = slab.at[b1_row, :].set(jnp.asarray(b1, jnp.float32))
    slab = slab.at[w2_row:w2_row + A, :].set(jnp.asarray(w2, jnp.float32))
    slab = slab.at[b2_row, :A].set(jnp.asarray(b2, jnp.float32))
    return slab


def network_kernel(x_ref, p_ref, o_ref, *, S, H, A):
    # x: (B, S)   p: (8, H) packed slab   o: (B, A)
    w1t_row, b1_row, w2_row, b2_row, _ = _slab_layout(S, A)

    x = x_ref[...]

    # ---- layer1 + tanh: (B,S)@(S,H) on the otherwise-idle MXU (f32 accumulate).
    h = jnp.dot(x, p_ref[w1t_row:w1t_row + S, :],
                preferred_element_type=jnp.float32)
    h = jnp.tanh(h + p_ref[b1_row:b1_row + 1, :])                  # (B, H)

    # ---- layer5, fused across output columns: two lane (XLU) reductions build
    # the (B, A) logit tile, then ONE tanh / exp / axis-0 sum / recip / store.
    cols = [
        jnp.sum(h * p_ref[w2_row + a:w2_row + a + 1, :], axis=-1, keepdims=True)
        for a in range(A)                                          # static unroll (A=2)
    ]
    logits = jnp.concatenate(cols, axis=-1) + p_ref[b2_row:b2_row + 1, 0:A]  # (B, A)
    act = jnp.tanh(logits)

    # softmax over axis 0 (batch / sublane axis) == f.softmax(x, dim=0).
    # No max-subtraction: `act` is tanh-bounded in [-1, 1], so exp is in [1/e, e]
    # and cannot overflow/underflow in f32.
    e = jnp.exp(act)
    denom = jnp.sum(e, axis=0, keepdims=True)                      # (1, A)
    o_ref[...] = e * pl.reciprocal(denom, approx=False)            # single full store


@functools.partial(jax.jit, static_argnames=("actions",))
def network_forward(x, packed_params, *, actions):
    """x: (B, S) float32; packed_params: output of pack_params (built once).
    Returns (B, actions) f32 == softmax(tanh(tanh(x@w1.T+b1)@w2.T+b2), dim=0)."""
    x = jnp.asarray(x, jnp.float32)
    B, S = x.shape
    slab_rows, H = packed_params.shape
    A = actions

    flops = 2 * B * S * H + 2 * B * H * A + 2 * B * H + 4 * B * A
    transcendentals = B * H + 2 * B * A + A                  # tanh, tanh + exp, recip
    # Padded *tile* DMA traffic: lane dim pads to a multiple of 128, sublanes to 8.
    pad_b = _round_up(B, 8)
    bytes_accessed = 4 * (pad_b * _round_up(S, 128)           # x tile
                          + slab_rows * _round_up(H, 128)     # param slab tile
                          + pad_b * _round_up(A, 128))        # output tile

    full = lambda: pl.BlockSpec(memory_space=pltpu.VMEM)
    return pl.pallas_call(
        functools.partial(network_kernel, S=S, H=H, A=A),
        out_shape=jax.ShapeDtypeStruct((B, A), jnp.float32),
        in_specs=[full(), full()],
        out_specs=full(),
        cost_estimate=pl.CostEstimate(
            flops=flops,
            transcendentals=transcendentals,
            bytes_accessed=bytes_accessed,
        ),
    )(x, packed_params)


def network_reference(x, w1, b1, w2, b2):
    h = jnp.tanh(x @ w1.T + b1)
    a = jnp.tanh(h @ w2.T + b2)
    return jax.nn.softmax(a, axis=0)


if __name__ == "__main__":
    # CartPole-like sizes: state_vars=4, actions=2; small batch of states.
    B, S, H, A = 8, 4, 20, 2

    key = jax.random.PRNGKey(0)
    kx, k1, k2, k3, k4 = jax.random.split(key, 5)

    # Deterministic parameter init (PyTorch-Linear-style uniform bounds).
    lim1 = 1.0 / jnp.sqrt(jnp.float32(S))
    lim2 = 1.0 / jnp.sqrt(jnp.float32(H))
    w1 = jax.random.uniform(k1, (H, S), jnp.float32, -lim1, lim1)
    b1 = jax.random.uniform(k2, (H,), jnp.float32, -lim1, lim1)
    w2 = jax.random.uniform(k3, (A, H), jnp.float32, -lim2, lim2)
    b2 = jax.random.uniform(k4, (A,), jnp.float32, -lim2, lim2)

    x = jax.random.normal(kx, (B, S), jnp.float32)

    # One-time parameter packing.
    packed = jax.block_until_ready(pack_params(w1, b1, w2, b2))

    out = network_forward(x, packed, actions=A)
    out = jax.block_until_ready(out)

    ref = network_reference(x, w1, b1, w2, b2)
    assert out.shape == (B, A)
    assert jnp.allclose(out, ref, atol=2e-5, rtol=2e-5), "mismatch vs reference"

    print("KERNEL_OK")
</pallas_src>

<mosaic_0001>
module attributes {stable_mosaic.version = 11 : i64} {
  func.func @network_kernel(%arg0: memref<8x4xf32, #tpu.memory_space<vmem>>, %arg1: memref<8x20xf32, #tpu.memory_space<vmem>>, %arg2: memref<8x2xf32, #tpu.memory_space<vmem>>) attributes {dimension_semantics = [], scalar_prefetch = 0 : i64, scratch_operands = 0 : i64, tpu.core_type = #tpu.core_type<tc>} {
    %c0 = arith.constant 0 : index
    %c0_0 = arith.constant 0 : index
    %0 = vector.load %arg0[%c0, %c0_0] : memref<8x4xf32, #tpu.memory_space<vmem>>, vector<8x4xf32>
    %c0_1 = arith.constant 0 : index
    %c0_2 = arith.constant 0 : index
    %1 = vector.load %arg1[%c0_1, %c0_2] : memref<8x20xf32, #tpu.memory_space<vmem>>, vector<4x20xf32>
    %cst = arith.constant dense<0.000000e+00> : vector<8x20xf32>
    %2 = tpu.matmul %0, %1, %cst {dimension_numbers = #tpu.dot_dimension_numbers<[1], [0], [0], [1], [0, 0, 1, 1], [], []>} : vector<8x4xf32>, vector<4x20xf32>, vector<8x20xf32> -> vector<8x20xf32>
    %c4 = arith.constant 4 : index
    %c0_3 = arith.constant 0 : index
    %3 = vector.load %arg1[%c4, %c0_3] : memref<8x20xf32, #tpu.memory_space<vmem>>, vector<1x20xf32>
    %4 = vector.broadcast %3 : vector<1x20xf32> to vector<8x20xf32>
    %5 = arith.addf %2, %4 : vector<8x20xf32>
    %6 = math.tanh %5 : vector<8x20xf32>
    %c5 = arith.constant 5 : index
    %c0_4 = arith.constant 0 : index
    %7 = vector.load %arg1[%c5, %c0_4] : memref<8x20xf32, #tpu.memory_space<vmem>>, vector<1x20xf32>
    %8 = vector.broadcast %7 : vector<1x20xf32> to vector<8x20xf32>
    %9 = arith.mulf %6, %8 : vector<8x20xf32>
    %cst_5 = arith.constant dense<0.000000e+00> : vector<8xf32>
    %10 = vector.multi_reduction <add>, %9, %cst_5 [1] : vector<8x20xf32> to vector<8xf32>
    %11 = vector.shape_cast %10 : vector<8xf32> to vector<8x1xf32>
    %c6 = arith.constant 6 : index
    %c0_6 = arith.constant 0 : index
    %12 = vector.load %arg1[%c6, %c0_6] : memref<8x20xf32, #tpu.memory_space<vmem>>, vector<1x20xf32>
    %13 = vector.broadcast %12 : vector<1x20xf32> to vector<8x20xf32>
    %14 = arith.mulf %6, %13 : vector<8x20xf32>
    %cst_7 = arith.constant dense<0.000000e+00> : vector<8xf32>
    %15 = vector.multi_reduction <add>, %14, %cst_7 [1] : vector<8x20xf32> to vector<8xf32>
    %16 = vector.shape_cast %15 : vector<8xf32> to vector<8x1xf32>
    %17 = tpu.concatenate %11, %16 in 1 : vector<8x1xf32>, vector<8x1xf32> -> vector<8x2xf32>
    %c7 = arith.constant 7 : index
    %c0_8 = arith.constant 0 : index
    %18 = vector.load %arg1[%c7, %c0_8] : memref<8x20xf32, #tpu.memory_space<vmem>>, vector<1x2xf32>
    %19 = vector.broadcast %18 : vector<1x2xf32> to vector<8x2xf32>
    %20 = arith.addf %17, %19 : vector<8x2xf32>
    %21 = math.tanh %20 : vector<8x2xf32>
    %22 = math.exp %21 : vector<8x2xf32>
    %cst_9 = arith.constant dense<0.000000e+00> : vector<2xf32>
    %23 = vector.multi_reduction <add>, %22, %cst_9 [0] : vector<8x2xf32> to vector<2xf32>
    %24 = vector.shape_cast %23 : vector<2xf32> to vector<1x2xf32>
    %25 = tpu.reciprocal %24 : vector<1x2xf32> -> vector<1x2xf32>
    %26 = vector.broadcast %25 : vector<1x2xf32> to vector<8x2xf32>
    %27 = arith.mulf %22, %26 : vector<8x2xf32>
    %c0_10 = arith.constant 0 : index
    %c0_11 = arith.constant 0 : index
    %28 = vector.load %arg2[%c0_10, %c0_11] : memref<8x2xf32, #tpu.memory_space<vmem>>, vector<8x2xf32>
    tpu.vector_store %arg2[%c0_10, %c0_11], %27 {strides = array<i32>} : memref<8x2xf32, #tpu.memory_space<vmem>>, vector<8x2xf32>,
    return
  }
}

</mosaic_0001>

<llo_original>
// kernel: network_forward.1
$region0: #{network_forward.1}
  #allocation0 [shape = 'u32[]', space=smem, size = 0x4, offset = 0x4, fixed_abs, tag = 'smem constant byte address 0x4 - core index']
  #allocation1 [shape = 'u32[72,128]{1,0:T(1,128)}', space=vmem, size = 0x9000, scoped, tag = 'internal scratch']
  %s0 = inlined_call_operand.vmem [shape: f32[8,4], index: 0, kind: input, shape index: {}]
  %s1 = inlined_call_operand.vmem [shape: f32[8,20], index: 1, kind: input, shape index: {}]
  %s2 = inlined_call_operand.vmem [shape: f32[8,2], index: 2, kind: output, shape index: {}]
  %s3 = sld [smem:[#allocation0]]
  $region18: #{network_forward.1} parent=0
    _
  %s5 = ssub.s32 1, %s3
  %s6 = scalar_select 0, %s5, %s3
  // Predicated region
  $region2: #{network_forward.1} parent=0 // pred_check
    _
  $region3: #{network_forward.1} parent=0 // pred_check_branch
    %8 = sbr.rel (0) target = $region5
  $region4: #{network_forward.1} parent=0 // pred_region
    _
  $region5: #{network_forward.1} parent=0 // pred_fallthru
    _
  // Predicated region
  $region6: #{network_forward.1} parent=0 // pred_check
    _
  $region7: #{network_forward.1} parent=0 // pred_check_branch
    %10 = sbr.rel (0) target = $region9
  $region8: #{network_forward.1} parent=0 // pred_region
    _
  $region9: #{network_forward.1} parent=0 // pred_fallthru
    _
  %v11 = vld [vmem:[%s0] sm:$0xff]
  %v12 = vld [vmem:[%s1] sm:$0xf]
  %v13 = vld [vmem:[%s1 + $0x4] sm:$0x1]
  %v14 = vperm.slane %v13, 0
  %vm15 = vcmask 31744
  %v17 = vsel %vm15, %v11, 0
  %vm19 = vcmask 1043456
  %v21 = vsel %vm19, %v12, 0
  %23 = vmatpush.msra.mxu0 0.0
  %24 = vmatpush.msra.mxu0 0.0
  %25 = vmatpush.msra.mxu0 0.0
  %26 = vmatpush.msra.mxu0 0.0
  %27 = vmatpush.msra.mxu0 0.0
  %28 = vmatpush.msra.mxu0 0.0
  %29 = vmatpush.msra.mxu0 0.0
  %30 = vmatpush.msra.mxu0 0.0
  %31 = vmatpush.msra.mxu0 0.0
  %32 = vmatpush.msra.mxu0 0.0
  %33 = vmatpush.msra.mxu0 0.0
  %34 = vmatpush.msra.mxu0 0.0
  %35 = vmatpush.msra.mxu0 0.0
  %36 = vmatpush.msra.mxu0 0.0
  %37 = vmatpush.msra.mxu0 0.0
  %38 = vmatpush.msra.mxu0 %v21
  %39 = vmatmul.f32.gmra.mxu0 %v17
  %v40 = vpop.f32.mrf.mxu0
  %v41 = vadd.f32 %v14, %v40
  %42 = vdwg.mxu0
  %v43 = vtanh.pop %v41
  %v44 = vld [vmem:[%s1 + $0x5] sm:$0x1]
  %v45 = vperm.slane %v44, 0
  %v46 = vmul.f32 %v43, %v45
  %vm47 = vcmask 162816
  %v48 = vsel %vm47, %v46, 0.0
  %49 = vadd.xlane.f32.xlu0 %v48
  %v50 = vpop.xlane.xlu0 %49
  %v51 = vld [vmem:[%s1 + $0x6] sm:$0x1]
  %v52 = vperm.slane %v51, 0
  %v53 = vmul.f32 %v43, %v52
  %v54 = vsel %vm47, %v53, 0.0
  %55 = vadd.xlane.f32.xlu0 %v54
  %v56 = vpop.xlane.xlu0 %55
  %vm57 = vcmask 7168
  %v58 = vsel %vm57, %v50, %v56
  %v59 = vld [vmem:[%s1 + $0x7] sm:$0x1]
  %v60 = vperm.slane %v59, 0
  %v61 = vadd.f32 %v58, %v60
  %v62 = vtanh.pop %v61
  %v63 = vmul.f32 %v62, 1.442695
  %v64 = vpow.pop %v63
  %vm65 = vcmask 15360
  %v66 = vsel %vm65, %v64, 0.0
  %v67 = vrot.slane %v66, 4
  %v68 = vadd.f32 %v66, %v67
  %v69 = vrot.slane %v68, 2
  %v70 = vadd.f32 %v68, %v69
  %v71 = vrot.slane %v70, 1
  %v72 = vadd.f32 %v70, %v71
  %v73 = vrcp.pop %v72
  %v74 = vmul.f32 %v72, %v73
  %v75 = vsub.f32 1.0, %v74
  %v76 = vmul.f32 %v73, %v75
  %v77 = vadd.f32 %v73, %v76
  %vm78 = vweird.f32 %v72
  %vm79 = vweird.f32 %v73
  %vm80 = vmor %vm78, %vm79
  %v81 = vsel %vm80, %v73, %v77
  %v82 = vand.u32 2147483647, %v72
  %vm83 = vcmp.eq.f32.partialorder %v82, 8.507059e+37
  %v84 = vand.u32 %v72, 2147483648
  %v85 = vor.u32 1.1754944e-38, %v84
  %v86 = vsel %vm83, %v85, %v81
  %v87 = vmul.f32 %v64, %v86
  %88 = vst.msk [vmem:[%s2] sm:$0xff] %vm65, %v87
  // Predicated region
  $region10: #{network_forward.1} parent=0 // pred_check
    _
  $region11: #{network_forward.1} parent=0 // pred_check_branch
    %90 = sbr.rel (0) target = $region13
  $region12: #{network_forward.1} parent=0 // pred_region
    _
  $region13: #{network_forward.1} parent=0 // pred_fallthru
    _
  // Predicated region
  $region14: #{network_forward.1} parent=0 // pred_check
    _
  $region15: #{network_forward.1} parent=0 // pred_check_branch
    %92 = sbr.rel (0) target = $region17
  $region16: #{network_forward.1} parent=0 // pred_region
    _
  $region17: #{network_forward.1} parent=0 // pred_fallthru
    _

</llo_original>
